<compile_context>
chip_gen: v7x
topology: tpu7x:2x2x1
jax: 0.10.0
libtpu: 0.0.40
codegen_flags: <defaults>
</compile_context>

<pallas_src>
import functools

import jax
import jax.numpy as jnp
from jax.experimental import pallas as pl
from jax.experimental.pallas import tpu as pltpu


def _cba_kernel(x_ref, w_ref, shift_ref, o_ref, *, compute_dtype):
    # x_ref:     (C_in, t_hw)   lane-dense pixel tile (leading N dim squeezed)
    # w_ref:     (C_out, C_in)  conv weight with BN scale folded in
    # shift_ref: (C_out, 1)     folded BN shift = beta - mean * scale (f32)
    # o_ref:     (C_out, t_hw)  output tile (f32)
    x = x_ref[...]
    if compute_dtype is not None:
        x = x.astype(compute_dtype)          # in-register cast, no HBM pass
    acc = jnp.dot(w_ref[...], x, preferred_element_type=jnp.float32)
    y = acc + shift_ref[...]
    o_ref[...] = jnp.maximum(y, 0.0).astype(o_ref.dtype)


def _pick_t_hw(HW, C_in, C_out, x_bytes, budget_bytes=12 << 20):
    """Largest lane-dense H*W tile whose double-buffered in+out footprint fits
    comfortably under the scoped-VMEM default on all of v5e/v6e/v7x."""
    if HW <= 8192:
        return HW                            # single block covers the row
    per_lane = 2 * (C_in * x_bytes + C_out * 4)   # 2x for double buffering
    t = budget_bytes // max(per_lane, 1)
    t = (t // 128) * 128
    return int(max(128, min(t, 8192)))


def cba_forward(x_nchw, w_oihw, bn_gamma, bn_beta, bn_mean, bn_var,
                eps=1e-5, compute_dtype=jnp.bfloat16):
    """Forward pass of CBA with default args (1x1 conv, groups=1, no bias).

    x_nchw : (N, C_in, H, W)
    w_oihw : (C_out, C_in, 1, 1)
    returns: (N, C_out, H, W) float32
    """
    N, C_in, H, W = x_nchw.shape
    C_out = w_oihw.shape[0]
    HW = H * W

    # NCHW -> (N, C_in, H*W): a pure reshape, no transpose / HBM round trip.
    x3d = x_nchw.reshape(N, C_in, HW)

    # Fold BatchNorm (inference stats): scale goes into the weight, shift stays
    # as a per-output-channel add in the kernel epilogue.
    scale = bn_gamma / jnp.sqrt(bn_var + eps)                   # (C_out,)
    w2d = w_oihw.reshape(C_out, C_in) * scale[:, None]          # (C_out, C_in)
    shift = (bn_beta - bn_mean * scale).reshape(C_out, 1).astype(jnp.float32)

    if compute_dtype is not None:
        w2d = w2d.astype(compute_dtype)      # tiny; x is cast per-tile in-kernel

    t_hw = _pick_t_hw(HW, C_in, C_out, x3d.dtype.itemsize)
    grid = (N, pl.cdiv(HW, t_hw))

    kernel = functools.partial(_cba_kernel, compute_dtype=compute_dtype)

    out3d = pl.pallas_call(
        kernel,
        out_shape=jax.ShapeDtypeStruct((N, C_out, HW), jnp.float32),
        grid_spec=pltpu.PrefetchScalarGridSpec(
            num_scalar_prefetch=0,
            grid=grid,
            in_specs=[
                pl.BlockSpec((None, C_in, t_hw), lambda n, t: (n, 0, t)),
                pl.BlockSpec((C_out, C_in), lambda n, t: (0, 0)),
                pl.BlockSpec((C_out, 1), lambda n, t: (0, 0)),
            ],
            out_specs=pl.BlockSpec((None, C_out, t_hw), lambda n, t: (n, 0, t)),
        ),
        compiler_params=pltpu.CompilerParams(
            dimension_semantics=("parallel", "parallel")),
    )(x3d, w2d, shift)

    # (N, C_out, H*W) -> NCHW is again a pure reshape.
    return out3d.reshape(N, C_out, H, W)


if __name__ == "__main__":
    # Module config (defaults): in_ch=4, out_ch=8, 1x1 conv, groups=1, no bias.
    in_ch, out_ch = 4, 8
    N, H, W = 2, 16, 16

    key = jax.random.PRNGKey(0)
    kx, kw, kg, kb = jax.random.split(key, 4)

    x = jax.random.normal(kx, (N, in_ch, H, W), dtype=jnp.float32)

    # Deterministic parameter init (shapes per nn.Conv2d / nn.BatchNorm2d).
    conv_w = 0.1 * jax.random.normal(kw, (out_ch, in_ch, 1, 1), dtype=jnp.float32)
    bn_gamma = 1.0 + 0.05 * jax.random.normal(kg, (out_ch,), dtype=jnp.float32)
    bn_beta = 0.05 * jax.random.normal(kb, (out_ch,), dtype=jnp.float32)
    bn_mean = jnp.zeros((out_ch,), dtype=jnp.float32)   # running_mean init
    bn_var = jnp.ones((out_ch,), dtype=jnp.float32)     # running_var init

    # Pure-JAX f32 reference (1x1 conv == einsum over channels).
    ref = jnp.einsum("nchw,oc->nohw", x, conv_w.reshape(out_ch, in_ch))
    ref_scale = bn_gamma / jnp.sqrt(bn_var + 1e-5)
    ref_shift = bn_beta - bn_mean * ref_scale
    ref = ref * ref_scale[None, :, None, None] + ref_shift[None, :, None, None]
    ref = jnp.maximum(ref, 0.0)

    # Fast path (bf16 matmul inputs, f32 accumulate/epilogue/output).
    out = cba_forward(x, conv_w, bn_gamma, bn_beta, bn_mean, bn_var)
    jax.block_until_ready(out)
    assert out.shape == (N, out_ch, H, W)
    assert jnp.allclose(out, ref, atol=2e-2, rtol=2e-2)

    # Exact f32 path.
    out_f32 = cba_forward(x, conv_w, bn_gamma, bn_beta, bn_mean, bn_var,
                          compute_dtype=None)
    jax.block_until_ready(out_f32)
    assert jnp.allclose(out_f32, ref, atol=1e-5, rtol=1e-5)

    print("KERNEL_OK")
</pallas_src>

<mosaic_0001>
module attributes {stable_mosaic.version = 11 : i64} {
  func.func @_cba_kernel(%arg0: i32, %arg1: i32, %arg2: memref<1x4x256xf32, #tpu.memory_space<vmem>>, %arg3: memref<8x4xbf16, #tpu.memory_space<vmem>>, %arg4: memref<8x1xf32, #tpu.memory_space<vmem>>, %arg5: memref<1x8x256xf32, #tpu.memory_space<vmem>>) attributes {dimension_semantics = [#tpu.dimension_semantics<parallel>, #tpu.dimension_semantics<parallel>], iteration_bounds = array<i64: 2, 1>, scalar_prefetch = 0 : i64, scratch_operands = 0 : i64, tpu.core_type = #tpu.core_type<tc>, window_params = [{transform_indices = @transform_0, window_bounds = array<i64: 1, 4, 256>}, {pipeline_mode = #tpu.pipeline_mode<synchronous>, transform_indices = @transform_1, window_bounds = array<i64: 8, 4>}, {pipeline_mode = #tpu.pipeline_mode<synchronous>, transform_indices = @transform_2, window_bounds = array<i64: 8, 1>}, {transform_indices = @transform_3, window_bounds = array<i64: 1, 8, 256>}]} {
    %c0 = arith.constant 0 : index
    %c0_0 = arith.constant 0 : index
    %c0_1 = arith.constant 0 : index
    %0 = vector.load %arg2[%c0, %c0_0, %c0_1] : memref<1x4x256xf32, #tpu.memory_space<vmem>>, vector<1x4x256xf32>
    %1 = vector.shape_cast %0 : vector<1x4x256xf32> to vector<4x256xf32>
    %2 = arith.truncf %1 : vector<4x256xf32> to vector<4x256xbf16>
    %c0_2 = arith.constant 0 : index
    %c0_3 = arith.constant 0 : index
    %3 = vector.load %arg3[%c0_2, %c0_3] : memref<8x4xbf16, #tpu.memory_space<vmem>>, vector<8x4xbf16>
    %cst = arith.constant dense<0.000000e+00> : vector<8x256xf32>
    %4 = tpu.matmul %3, %2, %cst {dimension_numbers = #tpu.dot_dimension_numbers<[1], [0], [0], [1], [0, 0, 1, 1], [], []>} : vector<8x4xbf16>, vector<4x256xbf16>, vector<8x256xf32> -> vector<8x256xf32>
    %c0_4 = arith.constant 0 : index
    %c0_5 = arith.constant 0 : index
    %5 = vector.load %arg4[%c0_4, %c0_5] : memref<8x1xf32, #tpu.memory_space<vmem>>, vector<8x1xf32>
    %6 = vector.broadcast %5 : vector<8x1xf32> to vector<8x256xf32>
    %7 = arith.addf %4, %6 : vector<8x256xf32>
    %cst_6 = arith.constant 0.000000e+00 : f32
    %8 = vector.broadcast %cst_6 : f32 to vector<8x256xf32>
    %9 = arith.maximumf %7, %8 : vector<8x256xf32>
    %c0_7 = arith.constant 0 : index
    %c0_8 = arith.constant 0 : index
    %c0_9 = arith.constant 0 : index
    %10 = vector.load %arg5[%c0_7, %c0_8, %c0_9] : memref<1x8x256xf32, #tpu.memory_space<vmem>>, vector<1x8x256xf32>
    %11 = vector.shape_cast %10 : vector<1x8x256xf32> to vector<8x256xf32>
    %12 = vector.shape_cast %9 : vector<8x256xf32> to vector<1x8x256xf32>
    tpu.vector_store %arg5[%c0_7, %c0_8, %c0_9], %12 {strides = array<i32>} : memref<1x8x256xf32, #tpu.memory_space<vmem>>, vector<1x8x256xf32>,
    return
  }
  func.func @transform_0(%arg0: i32, %arg1: i32) -> (i32, i32, i32) {
    %c0_i32 = arith.constant 0 : i32
    %c0_i32_0 = arith.constant 0 : i32
    return %arg0, %c0_i32, %arg1 : i32, i32, i32
  }
  func.func @transform_1(%arg0: i32, %arg1: i32) -> (i32, i32) {
    %c0_i32 = arith.constant 0 : i32
    %c0_i32_0 = arith.constant 0 : i32
    %c0_i32_1 = arith.constant 0 : i32
    return %c0_i32, %c0_i32_0 : i32, i32
  }
  func.func @transform_2(%arg0: i32, %arg1: i32) -> (i32, i32) {
    %c0_i32 = arith.constant 0 : i32
    %c0_i32_0 = arith.constant 0 : i32
    %c0_i32_1 = arith.constant 0 : i32
    return %c0_i32, %c0_i32_0 : i32, i32
  }
  func.func @transform_3(%arg0: i32, %arg1: i32) -> (i32, i32, i32) {
    %c0_i32 = arith.constant 0 : i32
    %c0_i32_0 = arith.constant 0 : i32
    return %arg0, %c0_i32, %arg1 : i32, i32, i32
  }
}

</mosaic_0001>

<llo_original>
// kernel: tpu_custom_call.1
$region0: #{tpu_custom_call.1}
  #allocation0 [shape = 'u32[]', space=smem, size = 0x4, offset = 0x4, fixed_abs, tag = 'smem constant byte address 0x4 - core index']
  #allocation1 [shape = 'u32[144,128]{1,0:T(1,128)}', space=vmem, size = 0x12000, scoped, tag = 'internal scratch']
  %s0 = inlined_call_operand.hbm [shape: f32[2,4,256], index: 0, kind: input, shape index: {}]
  %s1 = inlined_call_operand.vmem [shape: bf16[8,4], index: 1, kind: input, shape index: {}]
  %s2 = inlined_call_operand.vmem [shape: f32[8,1], index: 2, kind: input, shape index: {}]
  %s3 = inlined_call_operand.hbm [shape: f32[2,8,256], index: 3, kind: output, shape index: {}]
  %s4 = sld [smem:[#allocation0]]
  $region49: #{tpu_custom_call.1} parent=0
    _
  %s6 = ssub.s32 1, %s4
  %s7 = scalar_select 0, %s6, %s4
  $region1: #{tpu_custom_call.1} parent=0
    #allocation2 [shape = 'u8[8192]{0}', space=vmem, size = 0x2000, scoped, tag = 'input window, operand 0']
    #allocation3 [shape = 's32[2]{0}', space=sflag, size = 0x8, scoped, tag = 'scoped memory for tpu_custom_call.1']
    #allocation4 [shape = 's32[2]{0}', space=sflag, size = 0x8, scoped, tag = 'scoped memory for tpu_custom_call.1']
    #allocation5 [shape = 'u8[16384]{0}', space=vmem, size = 0x4000, scoped, tag = 'output window, operand 0']
    %8 = vsyncpa [#allocation3], 0
    %s9 = scalar_lea.sflag [#allocation3], 1
    %10 = vsyncpa %s9, 0
    %11 = vsyncpa [#allocation4], 0
    %s12 = scalar_lea.sflag [#allocation4], 1
    %13 = vsyncpa %s12, 0
    loop: start=0, step=1, limit=4
    $region2: #{tpu_custom_call.1} parent=1 // loop_pre_header
      _
    $region3: #{tpu_custom_call.1} parent=1 // loop_header
      %s15 = sphi 0, %s19
      %p16 = scmp.ge.s32.totalorder %s15, 4
      %s22 = sphi 0, %s34
      %s23 = sphi 0, %s30
      %s24 = sphi 0, %s22
      %s25 = sphi 0, %s23
      %s26 = sphi 0, %s24
      %s27 = sphi 0, %s25
      %s39 = sphi 0, %s41
      %s42 = sphi 0, %s39
      %s43 = sphi 0, %s42
      %s59 = sphi 0, %s43
      %s63 = sphi 0, %s63
      %s65 = sphi 0, %s63
      %s66 = sphi 0, %s65
      %s80 = sphi 0, %s66
      %s84 = sphi 0, %s84
      %s86 = sphi 0, %s84
      %s87 = sphi 0, %s86
      %s101 = sphi 0, %s87
      %s109 = sphi 0, %s111
      %s112 = sphi 0, %s109
      %s113 = sphi 0, %s112
      %s129 = sphi 0, %s113
    $region4: #{tpu_custom_call.1} parent=1 // loop_header_branch
      %18 = sbr.rel (%p16) target = $region8
    $region5: #{tpu_custom_call.1} parent=1 // loop_body
      %s20 = ssub.s32 %s15, 1
      %s21 = ssub.s32 %s15, 2
      %s28 = sadd.s32 1, %s23
      %p29 = scmp.ge.s32.totalorder %s28, 1
      %s30 = scalar_select %p29, 0, %s28
      %s31 = sadd.s32 1, %s22
      %s32 = scalar_select %p29, %s31, %s22
      %p33 = scmp.ge.s32.totalorder %s32, 2
      %s34 = scalar_select %p33, 0, %s32
      %s35 = ssub.s32 %s22, %s34
      %s36 = ssub.s32 %s23, %s30
      %s37 = sor.u32 %s35, %s36
      %p38 = scmp.eq.s32.totalorder %s37, 0
      %s40 = sadd.s32 %s39, 1
      %s41 = scalar_select %p38, %s39, %s40
      %p44 = pneg %p38
      %p45 = scmp.eq.s32.totalorder %s15, 1
      %p46 = por %p44, %p45
      %p47 = scmp.ne.s32.totalorder %s39, %s42
      %p48 = scmp.eq.s32.totalorder %s15, 0
      %p49 = por %p47, %p48
      %p50 = scmp.ne.s32.totalorder %s39, %s42
      %p51 = scmp.eq.s32.totalorder %s20, 1
      %p52 = por %p50, %p51
      %p53 = scmp.ne.s32.totalorder %s42, %s43
      %p54 = scmp.eq.s32.totalorder %s20, 0
      %p55 = por %p53, %p54
      %p56 = scmp.ne.s32.totalorder %s42, %s43
      %p57 = scmp.eq.s32.totalorder %s21, 1
      %p58 = por %p56, %p57
      %p60 = scmp.ne.s32.totalorder %s43, %s59
      %p61 = scmp.eq.s32.totalorder %s21, 0
      %p62 = por %p60, %p61
      %s64 = sadd.s32 %s63, 1
      %p67 = scmp.eq.s32.totalorder %s15, 1
      %p68 = scmp.ne.s32.totalorder %s63, %s65
      %p69 = scmp.eq.s32.totalorder %s15, 0
      %p70 = por %p68, %p69
      %p71 = scmp.ne.s32.totalorder %s63, %s65
      %p72 = scmp.eq.s32.totalorder %s20, 1
      %p73 = por %p71, %p72
      %p74 = scmp.ne.s32.totalorder %s65, %s66
      %p75 = scmp.eq.s32.totalorder %s20, 0
      %p76 = por %p74, %p75
      %p77 = scmp.ne.s32.totalorder %s65, %s66
      %p78 = scmp.eq.s32.totalorder %s21, 1
      %p79 = por %p77, %p78
      %p81 = scmp.ne.s32.totalorder %s66, %s80
      %p82 = scmp.eq.s32.totalorder %s21, 0
      %p83 = por %p81, %p82
      %s85 = sadd.s32 %s84, 1
      %p88 = scmp.eq.s32.totalorder %s15, 1
      %p89 = scmp.ne.s32.totalorder %s84, %s86
      %p90 = scmp.eq.s32.totalorder %s15, 0
      %p91 = por %p89, %p90
      %p92 = scmp.ne.s32.totalorder %s84, %s86
      %p93 = scmp.eq.s32.totalorder %s20, 1
      %p94 = por %p92, %p93
      %p95 = scmp.ne.s32.totalorder %s86, %s87
      %p96 = scmp.eq.s32.totalorder %s20, 0
      %p97 = por %p95, %p96
      %p98 = scmp.ne.s32.totalorder %s86, %s87
      %p99 = scmp.eq.s32.totalorder %s21, 1
      %p100 = por %p98, %p99
      %p102 = scmp.ne.s32.totalorder %s87, %s101
      %p103 = scmp.eq.s32.totalorder %s21, 0
      %p104 = por %p102, %p103
      %s105 = ssub.s32 %s22, %s34
      %s106 = ssub.s32 %s23, %s30
      %s107 = sor.u32 %s105, %s106
      %p108 = scmp.eq.s32.totalorder %s107, 0
      %s110 = sadd.s32 %s109, 1
      %s111 = scalar_select %p108, %s109, %s110
      %p114 = pneg %p108
      %p115 = scmp.eq.s32.totalorder %s15, 1
      %p116 = por %p114, %p115
      %p117 = scmp.ne.s32.totalorder %s109, %s112
      %p118 = scmp.eq.s32.totalorder %s15, 0
      %p119 = por %p117, %p118
      %p120 = scmp.ne.s32.totalorder %s109, %s112
      %p121 = scmp.eq.s32.totalorder %s20, 1
      %p122 = por %p120, %p121
      %p123 = scmp.ne.s32.totalorder %s112, %s113
      %p124 = scmp.eq.s32.totalorder %s20, 0
      %p125 = por %p123, %p124
      %p126 = scmp.ne.s32.totalorder %s112, %s113
      %p127 = scmp.eq.s32.totalorder %s21, 1
      %p128 = por %p126, %p127
      %p130 = scmp.ne.s32.totalorder %s113, %s129
      %p131 = scmp.eq.s32.totalorder %s21, 0
      %p132 = por %p130, %p131
      %p133 = scmp.le.s32.totalorder 1, %s15
      %p134 = scmp.lt.s32.totalorder %s15, 3
      %p135 = pnand %p133, %p134
      %p136 = pneg %p135
      // Predicated region
      $region9: #{tpu_custom_call.1} parent=5 // pred_check
        _
      $region10: #{tpu_custom_call.1} parent=5 // pred_check_branch
        %138 = sbr.rel (%p135) target = $region12
      $region11: #{tpu_custom_call.1} parent=5 // pred_region
        %s139 = ssub.s32 %s15, 1
        // Predicated region
        $region13: #{tpu_custom_call.1} parent=11 // pred_check
          %p140 = pneg %p76
        $region14: #{tpu_custom_call.1} parent=11 // pred_check_branch
          %142 = sbr.rel (%p140) target = $region16
        $region15: #{tpu_custom_call.1} parent=11 // pred_region
          _
        $region16: #{tpu_custom_call.1} parent=11 // pred_fallthru
          _
        // Predicated region
        $region17: #{tpu_custom_call.1} parent=11 // pred_check
          %p143 = pneg %p97
        $region18: #{tpu_custom_call.1} parent=11 // pred_check_branch
          %145 = sbr.rel (%p143) target = $region20
        $region19: #{tpu_custom_call.1} parent=11 // pred_region
          _
        $region20: #{tpu_custom_call.1} parent=11 // pred_fallthru
          _
      $region12: #{tpu_custom_call.1} parent=5 // pred_fallthru
        _
      %p146 = scmp.lt.s32.totalorder %s15, 2
      // Predicated region
      $region21: #{tpu_custom_call.1} parent=5 // pred_check
        %p147 = pneg %p146
      $region22: #{tpu_custom_call.1} parent=5 // pred_check_branch
        %149 = sbr.rel (%p147) target = $region24
      $region23: #{tpu_custom_call.1} parent=5 // pred_region
        // Predicated region
        $region25: #{tpu_custom_call.1} parent=23 // pred_check
          %p150 = pneg %p49
        $region26: #{tpu_custom_call.1} parent=23 // pred_check_branch
          %152 = sbr.rel (%p150) target = $region28
        $region27: #{tpu_custom_call.1} parent=23 // pred_region
          %s153 = sand.u32 %s39, 1
          %s154 = scalar_lea.sflag [#allocation3], %s153
          %s155 = sand.u32 %s39, 1
          %s156 = smul.addr %s155, 8
          %s157 = scalar_lea.vmem [#allocation2], %s156
          %s158 = smul.u32 2, %s23
          %s160 = ssub.s32 128, 128
          %161 = vsyncadd %s154, %s160
          %s162 = smul.addr %s22, 2
          %s163 = sadd.s32 %s158, %s162
          %s164 = smul.addr %s163, 64
          %s165 = scalar_lea.hbm %s0, %s164
          %s167 = sshll.u32 %s157, 4
          %s168 = int_to_ptr.vmem [resolvable:$true] %s167
          %170 = dma.hbm_to_vmem [thread:$0]  %s165, 128, %s168, %s154
        $region28: #{tpu_custom_call.1} parent=23 // pred_fallthru
          _
      $region24: #{tpu_custom_call.1} parent=5 // pred_fallthru
        _
      %p171 = scmp.le.s32.totalorder 1, %s15
      %p172 = scmp.lt.s32.totalorder %s15, 3
      %p173 = pnand %p171, %p172
      %p174 = pneg %p173
      // Predicated region
      $region29: #{tpu_custom_call.1} parent=5 // pred_check
        _
      $region30: #{tpu_custom_call.1} parent=5 // pred_check_branch
        %176 = sbr.rel (%p173) target = $region32
      $region31: #{tpu_custom_call.1} parent=5 // pred_region
        %s177 = ssub.s32 %s15, 1
        %s178 = sand.u32 %s42, 1
        %s179 = scalar_lea.sflag [#allocation3], %s178
        %s180 = sand.u32 %s42, 1
        %s181 = smul.addr %s180, 8
        %s182 = scalar_lea.vmem [#allocation2], %s181
        // Predicated region
        $region33: #{tpu_custom_call.1} parent=31 // pred_check
          %p183 = pneg %p55
        $region34: #{tpu_custom_call.1} parent=31 // pred_check_branch
          %185 = sbr.rel (%p183) target = $region36
        $region35: #{tpu_custom_call.1} parent=31 // pred_region
          %186 = dma.done %s179, 128
        $region36: #{tpu_custom_call.1} parent=31 // pred_fallthru
          _
        %s187 = sand.u32 %s42, 1
        %s188 = scalar_lea.sflag [#allocation3], %s187
        %s189 = sand.u32 %s42, 1
        %s190 = smul.addr %s189, 8
        %s191 = scalar_lea.vmem [#allocation2], %s190
        %p192 = pneg %p55
        %p193 = pneg %p52
        %p194 = pneg %p76
        %p195 = pneg %p73
        %p196 = pneg %p97
        %p197 = pneg %p94
        %p198 = pneg %p125
        %p199 = pneg %p122
        %s200 = sand.u32 %s112, 1
        %s201 = scalar_lea.sflag [#allocation4], %s200
        %s202 = sand.u32 %s112, 1
        %s203 = smul.addr %s202, 16
        %s204 = scalar_lea.vmem [#allocation5], %s203
        %s205 = smul.u32 2, %s25
        %s206 = smul.u32 2, %s25
        %v208 = vld [vmem:[%s182] sm:$0xff]
        %v210 = vcombine.high %v208, %v208
        %v212 = vpack.c.bf16 %v208, %v208
        %v213 = vpack.c.bf16 %v210, %v210
        %v214 = vld [vmem:[%s1] sm:$0xf]
        %v215 = vld [vmem:[%s2] sm:$0xff]
        %217 = vset.pattern.permute.xlu0 0
        %218 = vperm.xlu0 %217, %v215
        %v219 = vpop.permute.xlu0 %218
        %vm221 = vcmask 31744
        %v223 = vsel %vm221, %v214, 0
        %vm225 = vcmask 1041408
        %v227 = vsel %vm225, %v212, 0
        %v230 = vsel %vm225, %v213, 0
        %232 = vmatprep.subr.bf16.mxu0 %v230
        %233 = vmatpush1.bf16.msra.mxu0 %v227
        %234 = vmatprep.subr.bf16.mxu0 0
        %235 = vmatpush1.bf16.msra.mxu0 0
        %236 = vmatprep.subr.bf16.mxu0 0
        %237 = vmatpush1.bf16.msra.mxu0 0
        %238 = vmatprep.subr.bf16.mxu0 0
        %239 = vmatpush1.bf16.msra.mxu0 0
        %240 = vmatprep.subr.bf16.mxu0 0
        %241 = vmatpush1.bf16.msra.mxu0 0
        %242 = vmatprep.subr.bf16.mxu0 0
        %243 = vmatpush1.bf16.msra.mxu0 0
        %244 = vmatprep.subr.bf16.mxu0 0
        %245 = vmatpush1.bf16.msra.mxu0 0
        %246 = vmatprep.subr.bf16.mxu0 0
        %247 = vmatpush1.bf16.msra.mxu0 0
        %248 = vmatprep.subr.bf16.mxu0 0
        %249 = vmatpush1.bf16.msra.mxu0 0
        %250 = vmatprep.subr.bf16.mxu0 0
        %251 = vmatpush1.bf16.msra.mxu0 0
        %252 = vmatprep.subr.bf16.mxu0 0
        %253 = vmatpush1.bf16.msra.mxu0 0
        %254 = vmatprep.subr.bf16.mxu0 0
        %255 = vmatpush1.bf16.msra.mxu0 0
        %256 = vmatprep.subr.bf16.mxu0 0
        %257 = vmatpush1.bf16.msra.mxu0 0
        %258 = vmatprep.subr.bf16.mxu0 0
        %259 = vmatpush1.bf16.msra.mxu0 0
        %260 = vmatprep.subr.bf16.mxu0 0
        %261 = vmatpush1.bf16.msra.mxu0 0
        %262 = vmatprep.subr.bf16.mxu0 0
        %263 = vmatpush1.bf16.msra.mxu0 0
        %264 = vmatprep.mubr.bf16.mxu0 0
        %265 = vmatmul.mubr.bf16.gmra.mrb[0].mxu0 %v223
        %v266 = vpop.f32.mrb[0].mxu0
        %v267 = vadd.f32 %v219, %v266
        %v268 = vpop.f32.mrb[0].mxu0
        %v269 = vadd.f32 %v219, %v268
        %v270 = vpop.f32.mrb[0].mxu0
        %v271 = vpop.f32.mrb[0].mxu0
        %272 = vdwg.mxu0
        %v273 = vmax.f32 %v267, 0.0
        %v274 = vmax.f32 %v269, 0.0
        %275 = vst [vmem:[%s204] sm:$0xff] %v273
        %276 = vst [vmem:[%s204 + $0x8] sm:$0xff] %v274
        %s277 = sand.u32 %s112, 1
        %s278 = scalar_lea.sflag [#allocation4], %s277
        %s279 = sand.u32 %s112, 1
        %s280 = smul.addr %s279, 16
        %s281 = scalar_lea.vmem [#allocation5], %s280
        // Predicated region
        $region37: #{tpu_custom_call.1} parent=31 // pred_check
          %p282 = pneg %p122
        $region38: #{tpu_custom_call.1} parent=31 // pred_check_branch
          %284 = sbr.rel (%p282) target = $region40
        $region39: #{tpu_custom_call.1} parent=31 // pred_region
          %s285 = smul.u32 2, %s25
          %s287 = ssub.s32 256, 256
          %288 = vsyncadd %s278, %s287
          %s289 = smul.addr %s24, 2
          %s290 = sadd.s32 %s285, %s289
          %s291 = smul.addr %s290, 128
          %s292 = scalar_lea.hbm %s3, %s291
          %s294 = sshll.u32 %s281, 4
          %s295 = int_to_ptr.vmem [resolvable:$true] %s294
          %297 = dma.vmem_to_hbm [thread:$0]  %s295, 256, %s292, %s278
        $region40: #{tpu_custom_call.1} parent=31 // pred_fallthru
          _
      $region32: #{tpu_custom_call.1} parent=5 // pred_fallthru
        _
      %p298 = scmp.le.s32.totalorder 2, %s15
      // Predicated region
      $region41: #{tpu_custom_call.1} parent=5 // pred_check
        %p299 = pneg %p298
      $region42: #{tpu_custom_call.1} parent=5 // pred_check_branch
        %301 = sbr.rel (%p299) target = $region44
      $region43: #{tpu_custom_call.1} parent=5 // pred_region
        %s302 = ssub.s32 %s15, 2
        // Predicated region
        $region45: #{tpu_custom_call.1} parent=43 // pred_check
          %p303 = pneg %p128
        $region46: #{tpu_custom_call.1} parent=43 // pred_check_branch
          %305 = sbr.rel (%p303) target = $region48
        $region47: #{tpu_custom_call.1} parent=43 // pred_region
          %s306 = sand.u32 %s113, 1
          %s307 = scalar_lea.sflag [#allocation4], %s306
          %s308 = sand.u32 %s113, 1
          %s309 = smul.addr %s308, 16
          %s310 = scalar_lea.vmem [#allocation5], %s309
          %311 = dma.done %s307, 256
        $region48: #{tpu_custom_call.1} parent=43 // pred_fallthru
          _
      $region44: #{tpu_custom_call.1} parent=5 // pred_fallthru
        _
    $region6: #{tpu_custom_call.1} parent=1 // loop_footer
      %s19 = sadd.s32 1, %s15
    $region7: #{tpu_custom_call.1} parent=1 // loop_footer_branch
      %14 = sbr.rel target = $region3
    $region8: #{tpu_custom_call.1} parent=1 // loop_exit
      _
    %312 = vsyncpa [#allocation3], 1
    %s313 = scalar_lea.sflag [#allocation3], 1
    %314 = vsyncpa %s313, 1
    %315 = vsyncpa [#allocation4], 1
    %s316 = scalar_lea.sflag [#allocation4], 1
    %317 = vsyncpa %s316, 1

</llo_original>
